<compile_context>
chip_gen: v5e
topology: v5e:2x2
jax: 0.10.0
libtpu: 0.0.40
codegen_flags: <defaults>
</compile_context>

<pallas_src>
import functools

import jax
import jax.numpy as jnp
from jax import lax
from jax.experimental import pallas as pl
from jax.experimental.pallas import tpu as pltpu


def _round_up(x, m):
    return ((x + m - 1) // m) * m


def _vmem_capacity_bytes():
    """Per-TensorCore VMEM capacity; conservative v7x fallback if unknown."""
    try:
        info = pltpu.get_tpu_info()
        cap = int(getattr(info, "vmem_capacity_bytes", 0) or 0)
        if cap > 0:
            return cap
    except Exception:
        pass
    return 64 * 2 ** 20  # v7x per-TC VMEM (smallest across v5e/v6e/v7x)


def _est_vmem_bytes(row_tile, tk4, H, d_p, nk, act_it, w_it, resident):
    """Approximate per-core VMEM footprint of one pallas_call configuration."""
    act = 2 * row_tile * H * act_it              # double-buffered z tiles
    out = 2 * row_tile * d_p * act_it            # double-buffered output tiles
    acc = row_tile * d_p * 4                     # f32 accumulator scratch
    n_chunks = nk if resident else 1
    # weight blocks (Pallas allocates 2 buffers per input BlockSpec)
    w = 2 * n_chunks * (H * tk4 + tk4 * d_p + tk4) * w_it
    small = 2 * 3 * 8 * d_p * 4                  # b2 / gamma / beta tiles
    internal = row_tile * tk4 * (8 + w_it)       # f32 SiLU intermediate + temps
    return act + out + acc + w + small + internal


def _adapter_ln_kernel(z_ref, w1_ref, b1_ref, w2_ref, b2_ref, gamma_ref,
                       beta_ref, o_ref, acc_ref, *, resident, d_actual, eps):
    """grid = (row_tiles, 4H chunks); acc_ref: (row_tile, d_p) f32."""
    k = pl.program_id(1)

    @pl.when(k == 0)
    def _():
        acc_ref[...] = jnp.zeros_like(acc_ref)

    # Weight chunk for this 4H slice.  Resident mode: the whole chunked weight
    # sits in VMEM (constant index_map -> DMA'd from HBM exactly once) and we
    # index chunk k inside the kernel.  Streaming mode: BlockSpec delivers
    # chunk k from HBM through the pipeline.
    if resident:
        w1c = w1_ref[k]      # (H, tk4)
        b1c = b1_ref[k]      # (1, tk4)
        w2c = w2_ref[k]      # (tk4, d_p)
    else:
        w1c = w1_ref[0]
        b1c = b1_ref[0]
        w2c = w2_ref[0]

    # adapter[0] chunk: Linear(H, tk4-slice of 4H) on the MXU, f32 accumulation.
    h = jnp.dot(z_ref[...], w1c, preferred_element_type=jnp.float32)
    h = h + b1c.astype(jnp.float32)
    # adapter[1]: SiLU (elementwise -> exact per chunk).
    h = h * jax.nn.sigmoid(h)
    # adapter[2] chunk: Linear(tk4-slice of 4H, D), accumulated in f32.
    acc_ref[...] += jnp.dot(h.astype(w2c.dtype), w2c,
                            preferred_element_type=jnp.float32)

    # Fused LayerNorm epilogue on the last 4H chunk: mean and E[y^2] in a
    # single sweep; padded lanes are masked out of the statistics only (the
    # padded output columns are sliced off by the wrapper).
    @pl.when(k == pl.num_programs(1) - 1)
    def _():
        y = acc_ref[...] + b2_ref[...].astype(jnp.float32)
        dp = y.shape[-1]
        inv_d = 1.0 / d_actual
        if dp == d_actual:
            ym = y
        else:
            col = lax.broadcasted_iota(jnp.int32, y.shape, 1)
            ym = jnp.where(col < d_actual, y, 0.0)
        mean = jnp.sum(ym, axis=-1, keepdims=True) * inv_d
        var = jnp.sum(ym * ym, axis=-1, keepdims=True) * inv_d - mean * mean
        var = jnp.maximum(var, 0.0)
        out = ((y - mean) * lax.rsqrt(var + eps)
               * gamma_ref[...].astype(jnp.float32)
               + beta_ref[...].astype(jnp.float32))
        o_ref[...] = out.astype(o_ref.dtype)


def _adapter_forward_impl(z, w1c, b1c, w2c, b2p, gp, bp, *, d_actual, row_tile,
                          tk4, vmem_cap, force_streaming):
    B, S, H = z.shape
    nk = w1c.shape[0]
    d_p = w2c.shape[-1]
    rows = B * S

    # torch: z is cast to the adapter weight dtype before the adapter.
    if z.dtype != w1c.dtype:
        z = z.astype(w1c.dtype)
    act_it = z.dtype.itemsize
    w_it = w1c.dtype.itemsize

    # Row tile: clamp to the problem; keep >= 2 tiles on the parallel axis
    # when possible so both TensorCores get work under megacore (v7x).
    rt = _round_up(min(row_tile, _round_up(rows, 8)), 8)
    if rows <= rt and rows > 8:
        rt = _round_up(-(-rows // 2), 8)
    rows_p = _round_up(rows, rt)
    n_rt = rows_p // rt

    budget = int(vmem_cap * 0.75)
    resident = (not force_streaming) and (
        _est_vmem_bytes(rt, tk4, H, d_p, nk, act_it, w_it, True) <= budget)

    z2d = z.reshape(rows, H)
    if rows_p != rows:
        # Zero rows are exact (they are sliced off below).
        z2d = jnp.pad(z2d, ((0, rows_p - rows), (0, 0)))

    if resident:
        w_specs = [
            pl.BlockSpec((nk, H, tk4), lambda i, k: (0, 0, 0)),    # W1 resident
            pl.BlockSpec((nk, 1, tk4), lambda i, k: (0, 0, 0)),    # b1 resident
            pl.BlockSpec((nk, tk4, d_p), lambda i, k: (0, 0, 0)),  # W2 resident
        ]
    else:
        w_specs = [
            pl.BlockSpec((1, H, tk4), lambda i, k: (k, 0, 0)),     # W1 chunk k
            pl.BlockSpec((1, 1, tk4), lambda i, k: (k, 0, 0)),     # b1 chunk k
            pl.BlockSpec((1, tk4, d_p), lambda i, k: (k, 0, 0)),   # W2 chunk k
        ]

    est = _est_vmem_bytes(rt, tk4, H, d_p, nk, act_it, w_it, resident)
    vmem_limit = int(min(int(vmem_cap * 0.9), max(2 * est, 32 * 2 ** 20)))

    params_bytes = ((w1c.size + b1c.size + w2c.size) * w_it
                    + (b2p.size + gp.size + bp.size) * b2p.dtype.itemsize)
    weight_passes = 1 if resident else n_rt
    cost = pl.CostEstimate(
        flops=int(2 * rows_p * (H * nk * tk4 + nk * tk4 * d_p)),
        transcendentals=int(rows_p * nk * tk4),
        bytes_accessed=int(z2d.size * act_it + rows_p * d_p * act_it
                           + params_bytes * weight_passes),
    )

    kernel = functools.partial(_adapter_ln_kernel, resident=resident,
                               d_actual=d_actual, eps=1e-5)

    out2d = pl.pallas_call(
        kernel,
        out_shape=jax.ShapeDtypeStruct((rows_p, d_p), z.dtype),
        grid_spec=pltpu.PrefetchScalarGridSpec(
            num_scalar_prefetch=0,
            grid=(n_rt, nk),
            in_specs=[pl.BlockSpec((rt, H), lambda i, k: (i, 0))] + w_specs + [
                pl.BlockSpec((1, d_p), lambda i, k: (0, 0)),   # b2
                pl.BlockSpec((1, d_p), lambda i, k: (0, 0)),   # LN gamma
                pl.BlockSpec((1, d_p), lambda i, k: (0, 0)),   # LN beta
            ],
            out_specs=pl.BlockSpec((rt, d_p), lambda i, k: (i, 0)),
            scratch_shapes=[pltpu.VMEM((rt, d_p), jnp.float32)],
        ),
        compiler_params=pltpu.CompilerParams(
            dimension_semantics=("parallel", "arbitrary"),
            vmem_limit_bytes=vmem_limit,
        ),
        cost_estimate=cost,
    )(z2d, w1c, b1c, w2c, b2p, gp, bp)

    if rows_p != rows or d_p != d_actual:
        out2d = out2d[:rows, :d_actual]
    return out2d.reshape(B, S, d_actual)


def make_adapter_forward(w1, b1, w2, b2, gamma, beta, *, row_tile=512, tk4=512,
                         force_streaming=False):
    """Pad + chunk the frozen adapter/LayerNorm parameters once and return a
    jitted forward(z) for z of shape (B, S, H) -> (B, S, D)."""
    H, H4 = w1.shape
    D = w2.shape[1]
    w_it = w1.dtype.itemsize
    cap = _vmem_capacity_bytes()
    budget = int(cap * 0.75)

    # MXU-friendly alignment: multiples of 256 (v6e/v7x 256x256 MXU) when the
    # dims are large enough, 128 lanes otherwise.
    d_lane = 256 if D > 128 else 128
    d_p = _round_up(D, d_lane)
    k_lane = 256 if H4 > 128 else 128
    tk4 = _round_up(max(k_lane, min(tk4, _round_up(H4, k_lane))), k_lane)
    rt = _round_up(max(8, row_tile), 8)

    # Make sure the streaming fallback fits the per-core VMEM budget even at
    # the full row tile: shrink tk4 first (matters on v7x's 64 MiB/TC), then
    # the row tile.
    def _stream_est(rt_, tk_):
        return _est_vmem_bytes(rt_, tk_, H, d_p, 1, w_it, w_it, False)

    while _stream_est(rt, tk4) > budget and tk4 > k_lane:
        tk4 = max(k_lane, (tk4 // 2) // k_lane * k_lane)
    while _stream_est(rt, tk4) > budget and rt > 16:
        rt = max(8, _round_up(rt // 2, 8))

    h4_p = _round_up(H4, tk4)
    nk = h4_p // tk4

    # One-time parameter prep (frozen weights -> no per-call pad/transpose).
    # Zero padding is exact: SiLU(0 + 0) = 0 and zero W2 rows contribute
    # nothing; padded output lanes are masked out of the LayerNorm statistics
    # and sliced off by the wrapper.
    w1c = jnp.transpose(
        jnp.pad(w1, ((0, 0), (0, h4_p - H4))).reshape(H, nk, tk4), (1, 0, 2))
    b1c = jnp.pad(b1, (0, h4_p - H4)).reshape(nk, 1, tk4)
    w2c = jnp.pad(w2, ((0, h4_p - H4), (0, d_p - D))).reshape(nk, tk4, d_p)
    b2p = jnp.pad(b2, (0, d_p - D)).reshape(1, d_p)
    gp = jnp.pad(gamma, (0, d_p - D)).reshape(1, d_p)
    bp = jnp.pad(beta, (0, d_p - D)).reshape(1, d_p)

    fwd = jax.jit(functools.partial(
        _adapter_forward_impl, d_actual=D, row_tile=rt, tk4=tk4,
        vmem_cap=cap, force_streaming=force_streaming))

    def forward(z):
        return fwd(z, w1c, b1c, w2c, b2p, gp, bp)

    return forward


def _reference(z, w1, b1, w2, b2, gamma, beta):
    h = z.astype(jnp.float32) @ w1.astype(jnp.float32) + b1
    h = h * jax.nn.sigmoid(h)
    y = h @ w2.astype(jnp.float32) + b2
    mean = jnp.mean(y, axis=-1, keepdims=True)
    var = jnp.mean((y - mean) ** 2, axis=-1, keepdims=True)
    return (y - mean) / jnp.sqrt(var + 1e-5) * gamma + beta


def _make_case(key, B, S, H, D, dtype=jnp.float32):
    H4 = 4 * H
    k_z, k_w1, k_b1, k_w2, k_b2, k_g, k_bt = jax.random.split(key, 7)
    z = jax.random.normal(k_z, (B, S, H), dtype=dtype)
    w1 = (jax.random.normal(k_w1, (H, H4), dtype=jnp.float32)
          * (1.0 / jnp.sqrt(H))).astype(dtype)
    b1 = (jax.random.normal(k_b1, (H4,), dtype=jnp.float32) * 0.01).astype(dtype)
    w2 = (jax.random.normal(k_w2, (H4, D), dtype=jnp.float32)
          * (1.0 / jnp.sqrt(H4))).astype(dtype)
    b2 = (jax.random.normal(k_b2, (D,), dtype=jnp.float32) * 0.01).astype(dtype)
    gamma = (1.0 + 0.1 * jax.random.normal(k_g, (D,), dtype=jnp.float32)).astype(dtype)
    beta = (0.05 * jax.random.normal(k_bt, (D,), dtype=jnp.float32)).astype(dtype)
    return z, w1, b1, w2, b2, gamma, beta


if __name__ == "__main__":
    key = jax.random.PRNGKey(0)
    k1, k2 = jax.random.split(key, 2)

    # Case 1: small config consistent with the module:
    #   transformer_hidden H = 32, output_dim D = 64, seq = max_length = 8, B = 2.
    # Exercises the resident-weight path and the >=2-row-tile (megacore) split.
    z1, *p1 = _make_case(k1, B=2, S=8, H=32, D=64)
    fwd1 = make_adapter_forward(*p1)
    out1 = jax.block_until_ready(fwd1(z1))
    ref1 = _reference(z1, *p1)
    assert out1.shape == (2, 8, 64)
    assert jnp.allclose(out1, ref1, atol=1e-4, rtol=1e-4)

    # Case 2: exercises row padding (154 -> 192 rows at row_tile=64), the tiled
    # 4H reduction (H4=1024, tk4=256 -> 4 chunks) and the lane-padded LayerNorm
    # (D=192 -> 256), in both the resident and streaming weight layouts.
    z2, *p2 = _make_case(k2, B=2, S=77, H=256, D=192)
    fwd2 = make_adapter_forward(*p2, row_tile=64, tk4=256)
    out2 = jax.block_until_ready(fwd2(z2))
    ref2 = _reference(z2, *p2)
    assert out2.shape == (2, 77, 192)
    assert jnp.allclose(out2, ref2, atol=1e-3, rtol=1e-3)

    fwd2s = make_adapter_forward(*p2, row_tile=64, tk4=256, force_streaming=True)
    out2s = jax.block_until_ready(fwd2s(z2))
    assert jnp.allclose(out2s, ref2, atol=1e-3, rtol=1e-3)

    print("KERNEL_OK")
</pallas_src>

<mosaic_0001>
module attributes {stable_mosaic.version = 11 : i64} {
  func.func @_adapter_ln_kernel(%arg0: i32, %arg1: i32, %arg2: memref<8x32xf32, #tpu.memory_space<vmem>>, %arg3: memref<1x32x128xf32, #tpu.memory_space<vmem>>, %arg4: memref<1x1x128xf32, #tpu.memory_space<vmem>>, %arg5: memref<1x128x128xf32, #tpu.memory_space<vmem>>, %arg6: memref<1x128xf32, #tpu.memory_space<vmem>>, %arg7: memref<1x128xf32, #tpu.memory_space<vmem>>, %arg8: memref<1x128xf32, #tpu.memory_space<vmem>>, %arg9: memref<8x128xf32, #tpu.memory_space<vmem>>, %arg10: memref<8x128xf32, #tpu.memory_space<vmem>>) attributes {dimension_semantics = [#tpu.dimension_semantics<parallel>, #tpu.dimension_semantics<arbitrary>], iteration_bounds = array<i64: 2, 1>, scalar_prefetch = 0 : i64, scratch_operands = 1 : i64, tpu.core_type = #tpu.core_type<tc>, window_params = [{transform_indices = @transform_0, window_bounds = array<i64: 8, 32>}, {pipeline_mode = #tpu.pipeline_mode<synchronous>, transform_indices = @transform_1, window_bounds = array<i64: 1, 32, 128>}, {pipeline_mode = #tpu.pipeline_mode<synchronous>, transform_indices = @transform_2, window_bounds = array<i64: 1, 1, 128>}, {pipeline_mode = #tpu.pipeline_mode<synchronous>, transform_indices = @transform_3, window_bounds = array<i64: 1, 128, 128>}, {pipeline_mode = #tpu.pipeline_mode<synchronous>, transform_indices = @transform_4, window_bounds = array<i64: 1, 128>}, {pipeline_mode = #tpu.pipeline_mode<synchronous>, transform_indices = @transform_5, window_bounds = array<i64: 1, 128>}, {pipeline_mode = #tpu.pipeline_mode<synchronous>, transform_indices = @transform_6, window_bounds = array<i64: 1, 128>}, {transform_indices = @transform_7, window_bounds = array<i64: 8, 128>}]} {
    %c0_i32 = arith.constant 0 : i32
    %0 = arith.cmpi eq, %arg1, %c0_i32 : i32
    %1 = arith.extui %0 : i1 to i32
    %c0_i32_0 = arith.constant 0 : i32
    %2 = arith.cmpi ne, %1, %c0_i32_0 : i32
    scf.if %2 {
      %cst_16 = arith.constant 0.000000e+00 : f32
      %29 = vector.broadcast %cst_16 : f32 to vector<8x128xf32>
      %c0_17 = arith.constant 0 : index
      %c0_18 = arith.constant 0 : index
      %30 = vector.load %arg10[%c0_17, %c0_18] : memref<8x128xf32, #tpu.memory_space<vmem>>, vector<8x128xf32>
      tpu.vector_store %arg10[%c0_17, %c0_18], %29 {strides = array<i32>} : memref<8x128xf32, #tpu.memory_space<vmem>>, vector<8x128xf32>,
    } else {
    }
    %3 = arith.index_cast %arg1 : i32 to index
    %c0 = arith.constant 0 : index
    %c0_1 = arith.constant 0 : index
    %4 = vector.load %arg3[%3, %c0, %c0_1] : memref<1x32x128xf32, #tpu.memory_space<vmem>>, vector<1x32x128xf32>
    %5 = vector.shape_cast %4 : vector<1x32x128xf32> to vector<32x128xf32>
    %6 = arith.index_cast %arg1 : i32 to index
    %c0_2 = arith.constant 0 : index
    %c0_3 = arith.constant 0 : index
    %7 = vector.load %arg4[%6, %c0_2, %c0_3] : memref<1x1x128xf32, #tpu.memory_space<vmem>>, vector<1x1x128xf32>
    %8 = vector.shape_cast %7 : vector<1x1x128xf32> to vector<1x128xf32>
    %9 = arith.index_cast %arg1 : i32 to index
    %c0_4 = arith.constant 0 : index
    %c0_5 = arith.constant 0 : index
    %10 = vector.load %arg5[%9, %c0_4, %c0_5] : memref<1x128x128xf32, #tpu.memory_space<vmem>>, vector<1x128x128xf32>
    %11 = vector.shape_cast %10 : vector<1x128x128xf32> to vector<128x128xf32>
    %c0_6 = arith.constant 0 : index
    %c0_7 = arith.constant 0 : index
    %12 = vector.load %arg2[%c0_6, %c0_7] : memref<8x32xf32, #tpu.memory_space<vmem>>, vector<8x32xf32>
    %cst = arith.constant dense<0.000000e+00> : vector<8x128xf32>
    %13 = tpu.matmul %12, %5, %cst {dimension_numbers = #tpu.dot_dimension_numbers<[1], [0], [0], [1], [0, 0, 1, 1], [], []>} : vector<8x32xf32>, vector<32x128xf32>, vector<8x128xf32> -> vector<8x128xf32>
    %14 = vector.broadcast %8 : vector<1x128xf32> to vector<8x128xf32>
    %15 = arith.addf %13, %14 : vector<8x128xf32>
    %16 = arith.negf %15 : vector<8x128xf32>
    %17 = math.exp %16 : vector<8x128xf32>
    %cst_8 = arith.constant 1.000000e+00 : f32
    %18 = vector.broadcast %cst_8 : f32 to vector<8x128xf32>
    %19 = arith.addf %18, %17 : vector<8x128xf32>
    %20 = arith.divf %18, %19 : vector<8x128xf32>
    %21 = arith.mulf %15, %20 : vector<8x128xf32>
    %c0_9 = arith.constant 0 : index
    %c0_10 = arith.constant 0 : index
    %22 = vector.load %arg10[%c0_9, %c0_10] : memref<8x128xf32, #tpu.memory_space<vmem>>, vector<8x128xf32>
    %cst_11 = arith.constant dense<0.000000e+00> : vector<8x128xf32>
    %23 = tpu.matmul %21, %11, %cst_11 {dimension_numbers = #tpu.dot_dimension_numbers<[1], [0], [0], [1], [0, 0, 1, 1], [], []>} : vector<8x128xf32>, vector<128x128xf32>, vector<8x128xf32> -> vector<8x128xf32>
    %24 = arith.addf %22, %23 : vector<8x128xf32>
    %c0_12 = arith.constant 0 : index
    %c0_13 = arith.constant 0 : index
    %25 = vector.load %arg10[%c0_12, %c0_13] : memref<8x128xf32, #tpu.memory_space<vmem>>, vector<8x128xf32>
    tpu.vector_store %arg10[%c0_12, %c0_13], %24 {strides = array<i32>} : memref<8x128xf32, #tpu.memory_space<vmem>>, vector<8x128xf32>,
    %c0_i32_14 = arith.constant 0 : i32
    %26 = arith.cmpi eq, %arg1, %c0_i32_14 : i32
    %27 = arith.extui %26 : i1 to i32
    %c0_i32_15 = arith.constant 0 : i32
    %28 = arith.cmpi ne, %27, %c0_i32_15 : i32
    scf.if %28 {
      %c0_16 = arith.constant 0 : index
      %c0_17 = arith.constant 0 : index
      %29 = vector.load %arg10[%c0_16, %c0_17] : memref<8x128xf32, #tpu.memory_space<vmem>>, vector<8x128xf32>
      %c0_18 = arith.constant 0 : index
      %c0_19 = arith.constant 0 : index
      %30 = vector.load %arg6[%c0_18, %c0_19] : memref<1x128xf32, #tpu.memory_space<vmem>>, vector<1x128xf32>
      %31 = vector.broadcast %30 : vector<1x128xf32> to vector<8x128xf32>
      %32 = arith.addf %29, %31 : vector<8x128xf32>
      %33 = tpu.iota {dimensions = array<i32: 1>} : vector<8x128xi32>
      %c64_i32 = arith.constant 64 : i32
      %34 = vector.broadcast %c64_i32 : i32 to vector<8x128xi32>
      %35 = arith.cmpi slt, %33, %34 : vector<8x128xi32>
      %cst_20 = arith.constant 0.000000e+00 : f32
      %36 = vector.broadcast %cst_20 : f32 to vector<8x128xf32>
      %37 = arith.select %35, %32, %36 : vector<8x128xi1>, vector<8x128xf32>
      %cst_21 = arith.constant dense<0.000000e+00> : vector<8xf32>
      %38 = vector.multi_reduction <add>, %37, %cst_21 [1] : vector<8x128xf32> to vector<8xf32>
      %39 = vector.shape_cast %38 : vector<8xf32> to vector<8x1xf32>
      %cst_22 = arith.constant 1.562500e-02 : f32
      %40 = vector.broadcast %cst_22 : f32 to vector<8x1xf32>
      %41 = arith.mulf %39, %40 : vector<8x1xf32>
      %42 = arith.mulf %37, %37 : vector<8x128xf32>
      %cst_23 = arith.constant dense<0.000000e+00> : vector<8xf32>
      %43 = vector.multi_reduction <add>, %42, %cst_23 [1] : vector<8x128xf32> to vector<8xf32>
      %44 = vector.shape_cast %43 : vector<8xf32> to vector<8x1xf32>
      %cst_24 = arith.constant 1.562500e-02 : f32
      %45 = vector.broadcast %cst_24 : f32 to vector<8x1xf32>
      %46 = arith.mulf %44, %45 : vector<8x1xf32>
      %47 = arith.mulf %41, %41 : vector<8x1xf32>
      %48 = arith.subf %46, %47 : vector<8x1xf32>
      %cst_25 = arith.constant 0.000000e+00 : f32
      %49 = vector.broadcast %cst_25 : f32 to vector<8x1xf32>
      %50 = arith.maximumf %48, %49 : vector<8x1xf32>
      %51 = vector.broadcast %41 : vector<8x1xf32> to vector<8x128xf32>
      %52 = arith.subf %32, %51 : vector<8x128xf32>
      %cst_26 = arith.constant 9.99999974E-6 : f32
      %53 = vector.broadcast %cst_26 : f32 to vector<8x1xf32>
      %54 = arith.addf %50, %53 : vector<8x1xf32>
      %55 = math.rsqrt %54 : vector<8x1xf32>
      %56 = vector.broadcast %55 : vector<8x1xf32> to vector<8x128xf32>
      %57 = arith.mulf %52, %56 : vector<8x128xf32>
      %c0_27 = arith.constant 0 : index
      %c0_28 = arith.constant 0 : index
      %58 = vector.load %arg7[%c0_27, %c0_28] : memref<1x128xf32, #tpu.memory_space<vmem>>, vector<1x128xf32>
      %59 = vector.broadcast %58 : vector<1x128xf32> to vector<8x128xf32>
      %60 = arith.mulf %57, %59 : vector<8x128xf32>
      %c0_29 = arith.constant 0 : index
      %c0_30 = arith.constant 0 : index
      %61 = vector.load %arg8[%c0_29, %c0_30] : memref<1x128xf32, #tpu.memory_space<vmem>>, vector<1x128xf32>
      %62 = vector.broadcast %61 : vector<1x128xf32> to vector<8x128xf32>
      %63 = arith.addf %60, %62 : vector<8x128xf32>
      %c0_31 = arith.constant 0 : index
      %c0_32 = arith.constant 0 : index
      %64 = vector.load %arg9[%c0_31, %c0_32] : memref<8x128xf32, #tpu.memory_space<vmem>>, vector<8x128xf32>
      tpu.vector_store %arg9[%c0_31, %c0_32], %63 {strides = array<i32>} : memref<8x128xf32, #tpu.memory_space<vmem>>, vector<8x128xf32>,
    } else {
    }
    return
  }
  func.func @transform_0(%arg0: i32, %arg1: i32) -> (i32, i32) {
    %c0_i32 = arith.constant 0 : i32
    %c0_i32_0 = arith.constant 0 : i32
    return %arg0, %c0_i32 : i32, i32
  }
  func.func @transform_1(%arg0: i32, %arg1: i32) -> (i32, i32, i32) {
    %c0_i32 = arith.constant 0 : i32
    %c0_i32_0 = arith.constant 0 : i32
    %c0_i32_1 = arith.constant 0 : i32
    %c0_i32_2 = arith.constant 0 : i32
    return %c0_i32, %c0_i32_0, %c0_i32_1 : i32, i32, i32
  }
  func.func @transform_2(%arg0: i32, %arg1: i32) -> (i32, i32, i32) {
    %c0_i32 = arith.constant 0 : i32
    %c0_i32_0 = arith.constant 0 : i32
    %c0_i32_1 = arith.constant 0 : i32
    %c0_i32_2 = arith.constant 0 : i32
    return %c0_i32, %c0_i32_0, %c0_i32_1 : i32, i32, i32
  }
  func.func @transform_3(%arg0: i32, %arg1: i32) -> (i32, i32, i32) {
    %c0_i32 = arith.constant 0 : i32
    %c0_i32_0 = arith.constant 0 : i32
    %c0_i32_1 = arith.constant 0 : i32
    %c0_i32_2 = arith.constant 0 : i32
    return %c0_i32, %c0_i32_0, %c0_i32_1 : i32, i32, i32
  }
  func.func @transform_4(%arg0: i32, %arg1: i32) -> (i32, i32) {
    %c0_i32 = arith.constant 0 : i32
    %c0_i32_0 = arith.constant 0 : i32
    %c0_i32_1 = arith.constant 0 : i32
    return %c0_i32, %c0_i32_0 : i32, i32
  }
  func.func @transform_5(%arg0: i32, %arg1: i32) -> (i32, i32) {
    %c0_i32 = arith.constant 0 : i32
    %c0_i32_0 = arith.constant 0 : i32
    %c0_i32_1 = arith.constant 0 : i32
    return %c0_i32, %c0_i32_0 : i32, i32
  }
  func.func @transform_6(%arg0: i32, %arg1: i32) -> (i32, i32) {
    %c0_i32 = arith.constant 0 : i32
    %c0_i32_0 = arith.constant 0 : i32
    %c0_i32_1 = arith.constant 0 : i32
    return %c0_i32, %c0_i32_0 : i32, i32
  }
  func.func @transform_7(%arg0: i32, %arg1: i32) -> (i32, i32) {
    %c0_i32 = arith.constant 0 : i32
    %c0_i32_0 = arith.constant 0 : i32
    return %arg0, %c0_i32 : i32, i32
  }
}

</mosaic_0001>

<llo_original>
// kernel: _adapter_forward_impl.1
$region0: #{_adapter_forward_impl.1}
  #allocation0 [shape = 'u32[]', space=smem, size = 0x4, offset = 0x4, fixed_abs, tag = 'smem constant byte address 0x4 - core index']
  #allocation1 [shape = 'u32[72,128]{1,0:T(1,128)}', space=vmem, size = 0x9000, scoped, tag = 'internal scratch']
  #allocation2 [shape = 'f32[8,128]{1,0:T(8,128)}', space=vmem, size = 0x1000, scoped, tag = 'scratch operand']
  %s0 = inlined_call_operand.hbm [shape: f32[16,32], index: 0, kind: input, shape index: {}]
  %s1 = inlined_call_operand.hbm [shape: f32[1,32,128], index: 1, kind: input, shape index: {}]
  %s2 = inlined_call_operand.vmem [shape: f32[1,1,128], index: 2, kind: input, shape index: {}]
  %s3 = inlined_call_operand.hbm [shape: f32[1,128,128], index: 3, kind: input, shape index: {}]
  %s4 = inlined_call_operand.vmem [shape: f32[1,128], index: 4, kind: input, shape index: {}]
  %s5 = inlined_call_operand.vmem [shape: f32[1,128], index: 5, kind: input, shape index: {}]
  %s6 = inlined_call_operand.vmem [shape: f32[1,128], index: 6, kind: input, shape index: {}]
  %s7 = inlined_call_operand.vmem [shape: f32[16,128], index: 7, kind: output, shape index: {}]
  %s8 = sld [smem:[#allocation0]]
  $region81: #{_adapter_forward_impl.1} parent=0
    _
  %s10 = ssub.s32 1, %s8
  %s11 = scalar_select 0, %s10, %s8
  $region1: #{_adapter_forward_impl.1} parent=0
    #allocation3 [shape = 'u8[8192]{0}', space=vmem, size = 0x2000, scoped, tag = 'input window, operand 0']
    #allocation4 [shape = 's32[2]{0}', space=sflag, size = 0x8, scoped, tag = 'scoped memory for _adapter_forward_impl.1']
    #allocation5 [shape = 'u8[16384]{0}', space=vmem, size = 0x4000, scoped, tag = 'input window, operand 1, single buffered']
    #allocation6 [shape = 's32[1]{0}', space=sflag, size = 0x4, scoped, tag = 'scoped memory for _adapter_forward_impl.1']
    #allocation7 [shape = 'u8[65536]{0}', space=vmem, size = 0x10000, scoped, tag = 'input window, operand 3, single buffered']
    %12 = vsyncpa [#allocation4], 0
    %s13 = scalar_lea.sflag [#allocation4], 1
    %14 = vsyncpa %s13, 0
    %15 = vsyncpa [#allocation6], 0
    loop: start=0, step=1, limit=4
    $region2: #{_adapter_forward_impl.1} parent=1 // loop_pre_header
      _
    $region3: #{_adapter_forward_impl.1} parent=1 // loop_header
      %s17 = sphi 0, %s21
      %p18 = scmp.ge.s32.totalorder %s17, 4
      %s24 = sphi 0, %s36
      %s25 = sphi 0, %s32
      %s26 = sphi 0, %s24
      %s27 = sphi 0, %s25
      %s28 = sphi 0, %s26
      %s29 = sphi 0, %s27
      %s39 = sphi 0, %s41
      %s42 = sphi 0, %s39
      %s43 = sphi 0, %s42
      %s59 = sphi 0, %s43
      %s63 = sphi 0, %s63
      %s65 = sphi 0, %s63
      %s66 = sphi 0, %s65
      %s80 = sphi 0, %s66
      %s84 = sphi 0, %s84
      %s86 = sphi 0, %s84
      %s87 = sphi 0, %s86
      %s101 = sphi 0, %s87
      %s105 = sphi 0, %s105
      %s107 = sphi 0, %s105
      %s108 = sphi 0, %s107
      %s122 = sphi 0, %s108
      %s126 = sphi 0, %s126
      %s128 = sphi 0, %s126
      %s129 = sphi 0, %s128
      %s143 = sphi 0, %s129
      %s147 = sphi 0, %s147
      %s149 = sphi 0, %s147
      %s150 = sphi 0, %s149
      %s164 = sphi 0, %s150
      %s168 = sphi 0, %s168
      %s170 = sphi 0, %s168
      %s171 = sphi 0, %s170
      %s185 = sphi 0, %s171
      %s191 = sphi 0, %s193
      %s194 = sphi 0, %s191
      %s195 = sphi 0, %s194
      %s211 = sphi 0, %s195
    $region4: #{_adapter_forward_impl.1} parent=1 // loop_header_branch
      %20 = sbr.rel (%p18) target = $region8
    $region5: #{_adapter_forward_impl.1} parent=1 // loop_body
      %s22 = ssub.s32 %s17, 1
      %s23 = ssub.s32 %s17, 2
      %s30 = sadd.s32 1, %s25
      %p31 = scmp.ge.s32.totalorder %s30, 1
      %s32 = scalar_select %p31, 0, %s30
      %s33 = sadd.s32 1, %s24
      %s34 = scalar_select %p31, %s33, %s24
      %p35 = scmp.ge.s32.totalorder %s34, 2
      %s36 = scalar_select %p35, 0, %s34
      %s37 = ssub.s32 %s24, %s36
      %p38 = scmp.eq.s32.totalorder %s37, 0
      %s40 = sadd.s32 %s39, 1
      %s41 = scalar_select %p38, %s39, %s40
      %p44 = pneg %p38
      %p45 = scmp.eq.s32.totalorder %s17, 1
      %p46 = por %p44, %p45
      %p47 = scmp.ne.s32.totalorder %s39, %s42
      %p48 = scmp.eq.s32.totalorder %s17, 0
      %p49 = por %p47, %p48
      %p50 = scmp.ne.s32.totalorder %s39, %s42
      %p51 = scmp.eq.s32.totalorder %s22, 1
      %p52 = por %p50, %p51
      %p53 = scmp.ne.s32.totalorder %s42, %s43
      %p54 = scmp.eq.s32.totalorder %s22, 0
      %p55 = por %p53, %p54
      %p56 = scmp.ne.s32.totalorder %s42, %s43
      %p57 = scmp.eq.s32.totalorder %s23, 1
      %p58 = por %p56, %p57
      %p60 = scmp.ne.s32.totalorder %s43, %s59
      %p61 = scmp.eq.s32.totalorder %s23, 0
      %p62 = por %p60, %p61
      %s64 = sadd.s32 %s63, 1
      %p67 = scmp.eq.s32.totalorder %s17, 1
      %p68 = scmp.ne.s32.totalorder %s63, %s65
      %p69 = scmp.eq.s32.totalorder %s17, 0
      %p70 = por %p68, %p69
      %p71 = scmp.ne.s32.totalorder %s63, %s65
      %p72 = scmp.eq.s32.totalorder %s22, 1
      %p73 = por %p71, %p72
      %p74 = scmp.ne.s32.totalorder %s65, %s66
      %p75 = scmp.eq.s32.totalorder %s22, 0
      %p76 = por %p74, %p75
      %p77 = scmp.ne.s32.totalorder %s65, %s66
      %p78 = scmp.eq.s32.totalorder %s23, 1
      %p79 = por %p77, %p78
      %p81 = scmp.ne.s32.totalorder %s66, %s80
      %p82 = scmp.eq.s32.totalorder %s23, 0
      %p83 = por %p81, %p82
      %s85 = sadd.s32 %s84, 1
      %p88 = scmp.eq.s32.totalorder %s17, 1
      %p89 = scmp.ne.s32.totalorder %s84, %s86
      %p90 = scmp.eq.s32.totalorder %s17, 0
      %p91 = por %p89, %p90
      %p92 = scmp.ne.s32.totalorder %s84, %s86
      %p93 = scmp.eq.s32.totalorder %s22, 1
      %p94 = por %p92, %p93
      %p95 = scmp.ne.s32.totalorder %s86, %s87
      %p96 = scmp.eq.s32.totalorder %s22, 0
      %p97 = por %p95, %p96
      %p98 = scmp.ne.s32.totalorder %s86, %s87
      %p99 = scmp.eq.s32.totalorder %s23, 1
      %p100 = por %p98, %p99
      %p102 = scmp.ne.s32.totalorder %s87, %s101
      %p103 = scmp.eq.s32.totalorder %s23, 0
      %p104 = por %p102, %p103
      %s106 = sadd.s32 %s105, 1
      %p109 = scmp.eq.s32.totalorder %s17, 1
      %p110 = scmp.ne.s32.totalorder %s105, %s107
      %p111 = scmp.eq.s32.totalorder %s17, 0
      %p112 = por %p110, %p111
      %p113 = scmp.ne.s32.totalorder %s105, %s107
      %p114 = scmp.eq.s32.totalorder %s22, 1
      %p115 = por %p113, %p114
      %p116 = scmp.ne.s32.totalorder %s107, %s108
      %p117 = scmp.eq.s32.totalorder %s22, 0
      %p118 = por %p116, %p117
      %p119 = scmp.ne.s32.totalorder %s107, %s108
      %p120 = scmp.eq.s32.totalorder %s23, 1
      %p121 = por %p119, %p120
      %p123 = scmp.ne.s32.totalorder %s108, %s122
      %p124 = scmp.eq.s32.totalorder %s23, 0
      %p125 = por %p123, %p124
      %s127 = sadd.s32 %s126, 1
      %p130 = scmp.eq.s32.totalorder %s17, 1
      %p131 = scmp.ne.s32.totalorder %s126, %s128
      %p132 = scmp.eq.s32.totalorder %s17, 0
      %p133 = por %p131, %p132
      %p134 = scmp.ne.s32.totalorder %s126, %s128
      %p135 = scmp.eq.s32.totalorder %s22, 1
      %p136 = por %p134, %p135
      %p137 = scmp.ne.s32.totalorder %s128, %s129
      %p138 = scmp.eq.s32.totalorder %s22, 0
      %p139 = por %p137, %p138
      %p140 = scmp.ne.s32.totalorder %s128, %s129
      %p141 = scmp.eq.s32.totalorder %s23, 1
      %p142 = por %p140, %p141
      %p144 = scmp.ne.s32.totalorder %s129, %s143
      %p145 = scmp.eq.s32.totalorder %s23, 0
      %p146 = por %p144, %p145
      %s148 = sadd.s32 %s147, 1
      %p151 = scmp.eq.s32.totalorder %s17, 1
      %p152 = scmp.ne.s32.totalorder %s147, %s149
      %p153 = scmp.eq.s32.totalorder %s17, 0
      %p154 = por %p152, %p153
      %p155 = scmp.ne.s32.totalorder %s147, %s149
      %p156 = scmp.eq.s32.totalorder %s22, 1
      %p157 = por %p155, %p156
      %p158 = scmp.ne.s32.totalorder %s149, %s150
      %p159 = scmp.eq.s32.totalorder %s22, 0
      %p160 = por %p158, %p159
      %p161 = scmp.ne.s32.totalorder %s149, %s150
      %p162 = scmp.eq.s32.totalorder %s23, 1
      %p163 = por %p161, %p162
      %p165 = scmp.ne.s32.totalorder %s150, %s164
      %p166 = scmp.eq.s32.totalorder %s23, 0
      %p167 = por %p165, %p166
      %s169 = sadd.s32 %s168, 1
      %p172 = scmp.eq.s32.totalorder %s17, 1
      %p173 = scmp.ne.s32.totalorder %s168, %s170
      %p174 = scmp.eq.s32.totalorder %s17, 0
      %p175 = por %p173, %p174
      %p176 = scmp.ne.s32.totalorder %s168, %s170
      %p177 = scmp.eq.s32.totalorder %s22, 1
      %p178 = por %p176, %p177
      %p179 = scmp.ne.s32.totalorder %s170, %s171
      %p180 = scmp.eq.s32.totalorder %s22, 0
      %p181 = por %p179, %p180
      %p182 = scmp.ne.s32.totalorder %s170, %s171
      %p183 = scmp.eq.s32.totalorder %s23, 1
      %p184 = por %p182, %p183
      %p186 = scmp.ne.s32.totalorder %s171, %s185
      %p187 = scmp.eq.s32.totalorder %s23, 0
      %p188 = por %p186, %p187
      %s189 = ssub.s32 %s24, %s36
      %p190 = scmp.eq.s32.totalorder %s189, 0
      %s192 = sadd.s32 %s191, 1
      %s193 = scalar_select %p190, %s191, %s192
      %p196 = pneg %p190
      %p197 = scmp.eq.s32.totalorder %s17, 1
      %p198 = por %p196, %p197
      %p199 = scmp.ne.s32.totalorder %s191, %s194
      %p200 = scmp.eq.s32.totalorder %s17, 0
      %p201 = por %p199, %p200
      %p202 = scmp.ne.s32.totalorder %s191, %s194
      %p203 = scmp.eq.s32.totalorder %s22, 1
      %p204 = por %p202, %p203
      %p205 = scmp.ne.s32.totalorder %s194, %s195
      %p206 = scmp.eq.s32.totalorder %s22, 0
      %p207 = por %p205, %p206
      %p208 = scmp.ne.s32.totalorder %s194, %s195
      %p209 = scmp.eq.s32.totalorder %s23, 1
      %p210 = por %p208, %p209
      %p212 = scmp.ne.s32.totalorder %s195, %s211
      %p213 = scmp.eq.s32.totalorder %s23, 0
      %p214 = por %p212, %p213
      %p215 = scmp.le.s32.totalorder 1, %s17
      %p216 = scmp.lt.s32.totalorder %s17, 3
      %p217 = pnand %p215, %p216
      %p218 = pneg %p217
      // Predicated region
      $region9: #{_adapter_forward_impl.1} parent=5 // pred_check
        _
      $region10: #{_adapter_forward_impl.1} parent=5 // pred_check_branch
        %220 = sbr.rel (%p217) target = $region12
      $region11: #{_adapter_forward_impl.1} parent=5 // pred_region
        %s221 = ssub.s32 %s17, 1
        // Predicated region
        $region13: #{_adapter_forward_impl.1} parent=11 // pred_check
          %p222 = pneg %p76
        $region14: #{_adapter_forward_impl.1} parent=11 // pred_check_branch
          %224 = sbr.rel (%p222) target = $region16
        $region15: #{_adapter_forward_impl.1} parent=11 // pred_region
          %226 = vsyncadd [#allocation6], 0
          %s227 = sshll.u32 %s1, 4
          %s228 = int_to_ptr.hbm [resolvable:$true] %s227
          %s229 = sshll.u32 [#allocation5], 4
          %s230 = int_to_ptr.vmem [resolvable:$true] %s229
          %235 = dma.hbm_to_vmem [thread:$0]  %s228, 512, %s230, [#allocation6], 128, 128, 8
        $region16: #{_adapter_forward_impl.1} parent=11 // pred_fallthru
          _
        // Predicated region
        $region17: #{_adapter_forward_impl.1} parent=11 // pred_check
          %p236 = pneg %p97
        $region18: #{_adapter_forward_impl.1} parent=11 // pred_check_branch
          %238 = sbr.rel (%p236) target = $region20
        $region19: #{_adapter_forward_impl.1} parent=11 // pred_region
          _
        $region20: #{_adapter_forward_impl.1} parent=11 // pred_fallthru
          _
        // Predicated region
        $region21: #{_adapter_forward_impl.1} parent=11 // pred_check
          %p239 = pneg %p118
        $region22: #{_adapter_forward_impl.1} parent=11 // pred_check_branch
          %241 = sbr.rel (%p239) target = $region24
        $region23: #{_adapter_forward_impl.1} parent=11 // pred_region
          %243 = vsyncadd [#allocation6], 0
          %s244 = sshll.u32 %s3, 4
          %s245 = int_to_ptr.hbm [resolvable:$true] %s244
          %s246 = sshll.u32 [#allocation7], 4
          %s247 = int_to_ptr.vmem [resolvable:$true] %s246
          %252 = dma.hbm_to_vmem [thread:$0]  %s245, 2048, %s247, [#allocation6], 128, 128, 8
        $region24: #{_adapter_forward_impl.1} parent=11 // pred_fallthru
          _
        // Predicated region
        $region25: #{_adapter_forward_impl.1} parent=11 // pred_check
          %p253 = pneg %p139
        $region26: #{_adapter_forward_impl.1} parent=11 // pred_check_branch
          %255 = sbr.rel (%p253) target = $region28
        $region27: #{_adapter_forward_impl.1} parent=11 // pred_region
          _
        $region28: #{_adapter_forward_impl.1} parent=11 // pred_fallthru
          _
        // Predicated region
        $region29: #{_adapter_forward_impl.1} parent=11 // pred_check
          %p256 = pneg %p160
        $region30: #{_adapter_forward_impl.1} parent=11 // pred_check_branch
          %258 = sbr.rel (%p256) target = $region32
        $region31: #{_adapter_forward_impl.1} parent=11 // pred_region
          _
        $region32: #{_adapter_forward_impl.1} parent=11 // pred_fallthru
          _
        // Predicated region
        $region33: #{_adapter_forward_impl.1} parent=11 // pred_check
          %p259 = pneg %p181
        $region34: #{_adapter_forward_impl.1} parent=11 // pred_check_branch
          %261 = sbr.rel (%p259) target = $region36
        $region35: #{_adapter_forward_impl.1} parent=11 // pred_region
          _
        $region36: #{_adapter_forward_impl.1} parent=11 // pred_fallthru
          _
      $region12: #{_adapter_forward_impl.1} parent=5 // pred_fallthru
        _
      %p262 = scmp.lt.s32.totalorder %s17, 2
      // Predicated region
      $region37: #{_adapter_forward_impl.1} parent=5 // pred_check
        %p263 = pneg %p262
      $region38: #{_adapter_forward_impl.1} parent=5 // pred_check_branch
        %265 = sbr.rel (%p263) target = $region40
      $region39: #{_adapter_forward_impl.1} parent=5 // pred_region
        // Predicated region
        $region41: #{_adapter_forward_impl.1} parent=39 // pred_check
          %p266 = pneg %p49
        $region42: #{_adapter_forward_impl.1} parent=39 // pred_check_branch
          %268 = sbr.rel (%p266) target = $region44
        $region43: #{_adapter_forward_impl.1} parent=39 // pred_region
          %s269 = sand.u32 %s39, 1
          %s270 = scalar_lea.sflag [#allocation4], %s269
          %s271 = sand.u32 %s39, 1
          %s272 = smul.addr %s271, 8
          %s273 = scalar_lea.vmem [#allocation3], %s272
          %275 = vsyncadd %s270, 0
          %s276 = smul.addr %s24, 8
          %s277 = scalar_lea.hbm %s0, %s276
          %s279 = sshll.u32 %s277, 4
          %s280 = int_to_ptr.hbm [resolvable:$true] %s279
          %s281 = sshll.u32 %s273, 4
          %s282 = int_to_ptr.vmem [resolvable:$true] %s281
          %284 = dma.hbm_to_vmem [thread:$0]  %s280, 128, %s282, %s270
        $region44: #{_adapter_forward_impl.1} parent=39 // pred_fallthru
          _
      $region40: #{_adapter_forward_impl.1} parent=5 // pred_fallthru
        _
      %p285 = scmp.le.s32.totalorder 1, %s17
      %p286 = scmp.lt.s32.totalorder %s17, 3
      %p287 = pnand %p285, %p286
      %p288 = pneg %p287
      // Predicated region
      $region45: #{_adapter_forward_impl.1} parent=5 // pred_check
        _
      $region46: #{_adapter_forward_impl.1} parent=5 // pred_check_branch
        %290 = sbr.rel (%p287) target = $region48
      $region47: #{_adapter_forward_impl.1} parent=5 // pred_region
        %s291 = ssub.s32 %s17, 1
        %s292 = sand.u32 %s42, 1
        %s293 = scalar_lea.sflag [#allocation4], %s292
        %s294 = sand.u32 %s42, 1
        %s295 = smul.addr %s294, 8
        %s296 = scalar_lea.vmem [#allocation3], %s295
        // Predicated region
        $region49: #{_adapter_forward_impl.1} parent=47 // pred_check
          %p297 = pneg %p55
        $region50: #{_adapter_forward_impl.1} parent=47 // pred_check_branch
          %299 = sbr.rel (%p297) target = $region52
        $region51: #{_adapter_forward_impl.1} parent=47 // pred_region
          %301 = dma.done %s293, 128
        $region52: #{_adapter_forward_impl.1} parent=47 // pred_fallthru
          _
        // Predicated region
        $region53: #{_adapter_forward_impl.1} parent=47 // pred_check
          %p302 = pneg %p76
        $region54: #{_adapter_forward_impl.1} parent=47 // pred_check_branch
          %304 = sbr.rel (%p302) target = $region56
        $region55: #{_adapter_forward_impl.1} parent=47 // pred_region
          %306 = dma.done [#allocation6], 512
        $region56: #{_adapter_forward_impl.1} parent=47 // pred_fallthru
          _
        // Predicated region
        $region57: #{_adapter_forward_impl.1} parent=47 // pred_check
          %p307 = pneg %p118
        $region58: #{_adapter_forward_impl.1} parent=47 // pred_check_branch
          %309 = sbr.rel (%p307) target = $region60
        $region59: #{_adapter_forward_impl.1} parent=47 // pred_region
          %311 = dma.done [#allocation6], 2048
        $region60: #{_adapter_forward_impl.1} parent=47 // pred_fallthru
          _
        %s312 = sand.u32 %s42, 1
        %s313 = scalar_lea.sflag [#allocation4], %s312
        %s314 = sand.u32 %s42, 1
        %s315 = smul.addr %s314, 8
        %s316 = scalar_lea.vmem [#allocation3], %s315
        %p317 = pneg %p55
        %p318 = pneg %p52
        %p319 = pneg %p76
        %p320 = pneg %p73
        %p321 = pneg %p97
        %p322 = pneg %p94
        %p323 = pneg %p118
        %p324 = pneg %p115
        %p325 = pneg %p139
        %p326 = pneg %p136
        %p327 = pneg %p160
        %p328 = pneg %p157
        %p329 = pneg %p181
        %p330 = pneg %p178
        %p331 = pneg %p207
        %p332 = pneg %p204
        %p333 = scmp.lt.s32.totalorder %s26, 1
        %s334 = scalar_select %p333, %s26, 1
        %s335 = smul.addr %s334, 8
        %s336 = scalar_lea.vmem %s7, %s335
        %p337 = scmp.lt.s32.totalorder %s26, 1
        %s338 = scalar_select %p337, %s26, 1
        %s339 = smul.addr %s338, 8
        %s340 = scalar_lea.vmem %s7, %s339
        %p341 = scmp.eq.s32.totalorder %s27, 0
        // Predicated region
        $region61: #{_adapter_forward_impl.1} parent=47 // pred_check
          %p342 = pneg %p341
        $region62: #{_adapter_forward_impl.1} parent=47 // pred_check_branch
          %344 = sbr.rel (%p342) target = $region64
        $region63: #{_adapter_forward_impl.1} parent=47 // pred_region
          %345 = vst [vmem:[#allocation2] sm:$0xff] 0.0
        $region64: #{_adapter_forward_impl.1} parent=47 // pred_fallthru
          _
        %s346 = smul.u32 %s27, 32
        %s347 = scalar_lea.vmem [#allocation5], %s346
        %v348 = vld [vmem:[%s347] sm:$0xff]
        %v349 = vld [vmem:[%s347 + $0x8] sm:$0xff]
        %v350 = vld [vmem:[%s347 + $0x10] sm:$0xff]
        %v351 = vld [vmem:[%s347 + $0x18] sm:$0xff]
        %s352 = scalar_lea.vmem %s2, %s27
        %v353 = vld [vmem:[%s352] sm:$0x1]
        %s354 = smul.u32 %s27, 128
        %s355 = scalar_lea.vmem [#allocation7], %s354
        %v356 = vld [vmem:[%s355] sm:$0xff]
        %v357 = vld [vmem:[%s355 + $0x8] sm:$0xff]
        %v358 = vld [vmem:[%s355 + $0x10] sm:$0xff]
        %v359 = vld [vmem:[%s355 + $0x18] sm:$0xff]
        %v360 = vld [vmem:[%s355 + $0x20] sm:$0xff]
        %v361 = vld [vmem:[%s355 + $0x28] sm:$0xff]
        %v362 = vld [vmem:[%s355 + $0x30] sm:$0xff]
        %v363 = vld [vmem:[%s355 + $0x38] sm:$0xff]
        %v364 = vld [vmem:[%s355 + $0x40] sm:$0xff]
        %v365 = vld [vmem:[%s355 + $0x48] sm:$0xff]
        %v366 = vld [vmem:[%s355 + $0x50] sm:$0xff]
        %v367 = vld [vmem:[%s355 + $0x58] sm:$0xff]
        %v368 = vld [vmem:[%s355 + $0x60] sm:$0xff]
        %v369 = vld [vmem:[%s355 + $0x68] sm:$0xff]
        %v370 = vld [vmem:[%s355 + $0x70] sm:$0xff]
        %v371 = vld [vmem:[%s355 + $0x78] sm:$0xff]
        %v372 = vld [vmem:[%s296] sm:$0xff]
        %v374 = vperm.slane %v353, 0
        %vm376 = vcmask 261120
        %v378 = vsel %vm376, %v372, 0
        %380 = vmatpush.msra.mxu0 0.0
        %381 = vmatpush.msra.mxu0 0.0
        %382 = vmatpush.msra.mxu0 0.0
        %383 = vmatpush.msra.mxu0 0.0
        %384 = vmatpush.msra.mxu0 0.0
        %385 = vmatpush.msra.mxu0 0.0
        %386 = vmatpush.msra.mxu0 0.0
        %387 = vmatpush.msra.mxu0 0.0
        %388 = vmatpush.msra.mxu0 0.0
        %389 = vmatpush.msra.mxu0 0.0
        %390 = vmatpush.msra.mxu0 0.0
        %391 = vmatpush.msra.mxu0 0.0
        %392 = vmatpush.msra.mxu0 %v351
        %393 = vmatpush.msra.mxu0 %v350
        %394 = vmatpush.msra.mxu0 %v349
        %395 = vmatpush.msra.mxu0 %v348
        %396 = vmatmul.f32.gmra.mxu0 %v378
        %v397 = vpop.f32.mrf.mxu0
        %v398 = vadd.f32 %v374, %v397
        %399 = vdwg.mxu0
        %v400 = vxor.u32 %v398, 2147483648
        %v401 = vmul.f32 %v400, 1.442695
        %v402 = vpow.pop %v401
        %v403 = vadd.f32 %v402, 1.0
        %v404 = vrcp.pop %v403
        %v405 = vmul.f32 %v403, %v404
        %v406 = vsub.f32 1.0, %v405
        %v407 = vmul.f32 %v404, %v406
        %v408 = vadd.f32 %v404, %v407
        %vm409 = vweird.f32 %v403
        %vm410 = vweird.f32 %v404
        %vm411 = vmor %vm409, %vm410
        %v412 = vsel %vm411, %v404, %v408
        %v413 = vand.u32 2147483647, %v403
        %vm414 = vcmp.eq.f32.partialorder %v413, 8.507059e+37
        %v415 = vand.u32 %v403, 2147483648
        %v416 = vor.u32 1.1754944e-38, %v415
        %v417 = vsel %vm414, %v416, %v412
        %v418 = vmul.f32 1.0, %v417
        %v419 = vmul.f32 %v398, %v418
        %v420 = vld [vmem:[#allocation2] sm:$0xff]
        %421 = vmatpush.msra.mxu0 %v371
        %422 = vmatpush.msra.mxu0 %v370
        %423 = vmatpush.msra.mxu0 %v369
        %424 = vmatpush.msra.mxu0 %v368
        %425 = vmatpush.msra.mxu0 %v367
        %426 = vmatpush.msra.mxu0 %v366
        %427 = vmatpush.msra.mxu0 %v365
        %428 = vmatpush.msra.mxu0 %v364
        %429 = vmatpush.msra.mxu0 %v363
        %430 = vmatpush.msra.mxu0 %v362
        %431 = vmatpush.msra.mxu0 %v361
        %432 = vmatpush.msra.mxu0 %v360
        %433 = vmatpush.msra.mxu0 %v359
        %434 = vmatpush.msra.mxu0 %v358
        %435 = vmatpush.msra.mxu0 %v357
        %436 = vmatpush.msra.mxu0 %v356
        %437 = vmatmul.f32.gmra.mxu0 %v419
        %v438 = vpop.f32.mrf.mxu0
        %v439 = vadd.f32 0.0, %v438
        %440 = vdwg.mxu0
        %v441 = vadd.f32 %v420, %v439
        %442 = vst [vmem:[#allocation2] sm:$0xff] %v441
        // Predicated region
        $region65: #{_adapter_forward_impl.1} parent=47 // pred_check
          %p443 = pneg %p341
        $region66: #{_adapter_forward_impl.1} parent=47 // pred_check_branch
          %445 = sbr.rel (%p443) target = $region68
        $region67: #{_adapter_forward_impl.1} parent=47 // pred_region
          %v446 = vld [vmem:[#allocation2] sm:$0xff]
          %v447 = vld [vmem:[%s4] sm:$0x1]
          %v449 = vperm.slane %v447, 0
          %v451 = vadd.f32 %v446, %v449
          %v452 = vlaneseq
          %v453 = vand.u32 %v452, 127
          %vm454 = vcmp.lt.s32.totalorder %v453, 64
          %v455 = vsel %vm454, %v451, 0.0
          %456 = vadd.xlane.f32.xlu0 %v455
          %v457 = vpop.xlane.xlu0 %456
          %v458 = vmul.f32 %v457, 0.015625
          %v459 = vmul.f32 %v455, %v455
          %460 = vadd.xlane.f32.xlu0 %v459
          %v461 = vpop.xlane.xlu0 %460
          %v462 = vmul.f32 %v461, 0.015625
          %v463 = vmul.f32 %v458, %v458
          %v464 = vsub.f32 %v462, %v463
          %v465 = vmax.f32 %v464, 0.0
          %v466 = vsub.f32 %v451, %v458
          %v467 = vadd.f32 %v465, 1e-05
          %v468 = vrsqrt.pop %v467
          %v469 = vmul.f32 %v468, %v467
          %v470 = vmul.f32 %v469, %v468
          %v471 = vmul.f32 0.5, %v470
          %v472 = vsub.f32 1.5, %v471
          %v473 = vmul.f32 %v468, %v472
          %vm474 = vweird.f32 %v467
          %vm475 = vweird.f32 %v468
          %vm476 = vmor %vm474, %vm475
          %v477 = vsel %vm476, %v468, %v473
          %v478 = vmul.f32 %v466, %v477
          %v479 = vld [vmem:[%s5] sm:$0x1]
          %v481 = vperm.slane %v479, 0
          %v483 = vmul.f32 %v478, %v481
          %v484 = vld [vmem:[%s6] sm:$0x1]
          %v486 = vperm.slane %v484, 0
          %v488 = vadd.f32 %v483, %v486
          %489 = vst [vmem:[%s340] sm:$0xff] %v488
        $region68: #{_adapter_forward_impl.1} parent=47 // pred_fallthru
          _
        %p490 = scmp.lt.s32.totalorder %s26, 1
        %s491 = scalar_select %p490, %s26, 1
        %s492 = smul.addr %s491, 8
        %s493 = scalar_lea.vmem %s7, %s492
        // Predicated region
        $region69: #{_adapter_forward_impl.1} parent=47 // pred_check
          %p494 = pneg %p204
        $region70: #{_adapter_forward_impl.1} parent=47 // pred_check_branch
          %496 = sbr.rel (%p494) target = $region72
        $region71: #{_adapter_forward_impl.1} parent=47 // pred_region
          _
        $region72: #{_adapter_forward_impl.1} parent=47 // pred_fallthru
          _
      $region48: #{_adapter_forward_impl.1} parent=5 // pred_fallthru
        _
      %p497 = scmp.le.s32.totalorder 2, %s17
      // Predicated region
      $region73: #{_adapter_forward_impl.1} parent=5 // pred_check
        %p498 = pneg %p497
      $region74: #{_adapter_forward_impl.1} parent=5 // pred_check_branch
        %500 = sbr.rel (%p498) target = $region76
      $region75: #{_adapter_forward_impl.1} parent=5 // pred_region
        %s501 = ssub.s32 %s17, 2
        // Predicated region
        $region77: #{_adapter_forward_impl.1} parent=75 // pred_check
          %p502 = pneg %p210
        $region78: #{_adapter_forward_impl.1} parent=75 // pred_check_branch
          %504 = sbr.rel (%p502) target = $region80
        $region79: #{_adapter_forward_impl.1} parent=75 // pred_region
          %p505 = scmp.lt.s32.totalorder %s28, 1
          %s506 = scalar_select %p505, %s28, 1
          %s507 = smul.addr %s506, 8
          %s508 = scalar_lea.vmem %s7, %s507
        $region80: #{_adapter_forward_impl.1} parent=75 // pred_fallthru
          _
      $region76: #{_adapter_forward_impl.1} parent=5 // pred_fallthru
        _
    $region6: #{_adapter_forward_impl.1} parent=1 // loop_footer
      %s21 = sadd.s32 1, %s17
    $region7: #{_adapter_forward_impl.1} parent=1 // loop_footer_branch
      %16 = sbr.rel target = $region3
    $region8: #{_adapter_forward_impl.1} parent=1 // loop_exit
      _
    %509 = vsyncpa [#allocation4], 1
    %s510 = scalar_lea.sflag [#allocation4], 1
    %511 = vsyncpa %s510, 1
    %512 = vsyncpa [#allocation6], 1

</llo_original>
